<compile_context>
chip_gen: v7x
topology: tpu7x:2x2x1
jax: 0.10.0
libtpu: 0.0.40
codegen_flags: <defaults>
</compile_context>

<pallas_src>
import jax
import jax.numpy as jnp
from jax.experimental import pallas as pl
from jax.experimental.pallas import tpu as pltpu


def mlp_kernel(xT_ref, mT_ref, w1_ref, b1_ref, w2_ref, b2_ref, w3_ref, b3_ref,
               o_ref):
    xT = xT_ref[...]                                             # (F, TB) bf16

    # Hidden layer 1: Linear + ReLU         (H1, F) @ (F, TB) -> (H1, TB)
    h = jnp.dot(w1_ref[...], xT, preferred_element_type=jnp.float32)
    h = jnp.maximum(h + b1_ref[...], 0.0)

    # Hidden layer 2: Linear + ReLU + Dropout (H2, H1) @ (H1, TB) -> (H2, TB)
    h = jnp.dot(w2_ref[...], h.astype(jnp.bfloat16),
                preferred_element_type=jnp.float32)
    h = jnp.maximum(h + b2_ref[...], 0.0)
    h = h * mT_ref[...].astype(jnp.float32)      # pre-scaled keep mask (0 or 1/(1-p))

    # Output layer: Linear(->1) + Sigmoid     (1, H2) @ (H2, TB) -> (1, TB)
    z = jnp.dot(w3_ref[...], h.astype(jnp.bfloat16),
                preferred_element_type=jnp.float32)
    o_ref[...] = jax.nn.sigmoid(z + b3_ref[...]).astype(o_ref.dtype)


def torch_nn_core_forward(x, params, *, dropout_key=None, drop_p=0.2,
                          training=True, block_b=512):
    """Fused forward pass of TorchNNCore on TPU via one pallas_call.

    params: [(w1, b1), (w2, b2), (w3, b3)] in PyTorch layout, i.e.
            w has shape (out_features, in_features), b has shape (out_features,).
    """
    (w1, b1), (w2, b2), (w3, b3) = params
    B, F = x.shape
    H1, H2 = w1.shape[0], w2.shape[0]

    # Batch tiling: single full tile for small B, else 128-aligned tiles.
    if B <= block_b:
        tb, num_tiles = B, 1
    else:
        tb = max(128, (block_b // 128) * 128)
        num_tiles = pl.cdiv(B, tb)
    b_pad = num_tiles * tb

    xT = x.T.astype(jnp.bfloat16)                         # (F, B) batch on lanes
    if b_pad != B:
        xT = jnp.pad(xT, ((0, 0), (0, b_pad - B)))

    if training and drop_p > 0.0:
        if dropout_key is None:
            raise ValueError("dropout_key is required when training with drop_p > 0")
        keep = jax.random.bernoulli(dropout_key, 1.0 - drop_p, (H2, b_pad))
        maskT = (keep.astype(jnp.float32) * (1.0 / (1.0 - drop_p))).astype(jnp.bfloat16)
    else:
        maskT = jnp.ones((H2, b_pad), jnp.bfloat16)

    batch_spec = lambda rows: pl.BlockSpec((rows, tb), lambda i: (0, i))
    const_spec = lambda shape: pl.BlockSpec(shape, lambda i: (0, 0))

    out = pl.pallas_call(
        mlp_kernel,
        out_shape=jax.ShapeDtypeStruct((1, b_pad), jnp.float32),
        grid=(num_tiles,),
        in_specs=[
            batch_spec(F),          # xT        : pipelined per batch tile
            batch_spec(H2),         # dropout mask (pre-scaled), per batch tile
            const_spec((H1, F)),    # w1  (VMEM-resident, DMA'd once)
            const_spec((H1, 1)),    # b1
            const_spec((H2, H1)),   # w2
            const_spec((H2, 1)),    # b2
            const_spec((1, H2)),    # w3
            const_spec((1, 1)),     # b3
        ],
        out_specs=pl.BlockSpec((1, tb), lambda i: (0, i)),   # lane-dense output row
        compiler_params=pltpu.CompilerParams(
            dimension_semantics=("parallel",)),
    )(
        xT, maskT,
        w1.astype(jnp.bfloat16), b1.reshape(H1, 1).astype(jnp.float32),
        w2.astype(jnp.bfloat16), b2.reshape(H2, 1).astype(jnp.float32),
        w3.astype(jnp.bfloat16), b3.reshape(1, 1).astype(jnp.float32),
    )
    return out[0, :B].reshape(B, 1)


def reference_forward(x, params):
    """Pure-JAX f32 reference (eval mode, dropout off)."""
    (w1, b1), (w2, b2), (w3, b3) = params
    h = jnp.maximum(x @ w1.T + b1, 0.0)
    h = jnp.maximum(h @ w2.T + b2, 0.0)
    return jax.nn.sigmoid(h @ w3.T + b3)


def init_linear(key, fan_in, fan_out):
    """Deterministic init mimicking torch.nn.Linear (uniform +/- 1/sqrt(fan_in))."""
    kw, kb = jax.random.split(key)
    bound = 1.0 / float(fan_in) ** 0.5
    w = jax.random.uniform(kw, (fan_out, fan_in), jnp.float32, -bound, bound)
    b = jax.random.uniform(kb, (fan_out,), jnp.float32, -bound, bound)
    return w, b


if __name__ == "__main__":
    key = jax.random.PRNGKey(0)
    B, INPS = 8, 32
    HIDDENS = [64, 32]  # struct = [32, 64, 32, 1]

    k_x, k1, k2, k3, k_drop = jax.random.split(key, 5)
    x = jax.random.normal(k_x, (B, INPS), jnp.float32)
    params = [
        init_linear(k1, INPS, HIDDENS[0]),
        init_linear(k2, HIDDENS[0], HIDDENS[1]),
        init_linear(k3, HIDDENS[1], 1),
    ]

    # Eval-mode sanity check against a pure-JAX reference (bf16 MXU tolerance).
    out_eval = torch_nn_core_forward(x, params, drop_p=0.2, training=False)
    out_eval = jax.block_until_ready(out_eval)
    ref = reference_forward(x, params)
    assert out_eval.shape == (B, 1), out_eval.shape
    assert bool(jnp.allclose(out_eval, ref, atol=5e-2)), (out_eval, ref)

    # Training-mode run (dropout active).
    out = torch_nn_core_forward(x, params, dropout_key=k_drop, drop_p=0.2,
                                training=True)
    out = jax.block_until_ready(out)
    assert out.shape == (B, 1), out.shape
    assert bool(jnp.all((out >= 0.0) & (out <= 1.0)))
    print("KERNEL_OK")
</pallas_src>

<mosaic_0001>
module attributes {stable_mosaic.version = 11 : i64} {
  func.func @mlp_kernel(%arg0: i32, %arg1: memref<32x8xbf16, #tpu.memory_space<vmem>>, %arg2: memref<32x8xbf16, #tpu.memory_space<vmem>>, %arg3: memref<64x32xbf16, #tpu.memory_space<vmem>>, %arg4: memref<64x1xf32, #tpu.memory_space<vmem>>, %arg5: memref<32x64xbf16, #tpu.memory_space<vmem>>, %arg6: memref<32x1xf32, #tpu.memory_space<vmem>>, %arg7: memref<1x32xbf16, #tpu.memory_space<vmem>>, %arg8: memref<1x1xf32, #tpu.memory_space<vmem>>, %arg9: memref<1x8xf32, #tpu.memory_space<vmem>>) attributes {dimension_semantics = [#tpu.dimension_semantics<parallel>], iteration_bounds = array<i64: 1>, scalar_prefetch = 0 : i64, scratch_operands = 0 : i64, tpu.core_type = #tpu.core_type<tc>, window_params = [{transform_indices = @transform_0, window_bounds = array<i64: 32, 8>}, {transform_indices = @transform_1, window_bounds = array<i64: 32, 8>}, {pipeline_mode = #tpu.pipeline_mode<synchronous>, transform_indices = @transform_2, window_bounds = array<i64: 64, 32>}, {pipeline_mode = #tpu.pipeline_mode<synchronous>, transform_indices = @transform_3, window_bounds = array<i64: 64, 1>}, {pipeline_mode = #tpu.pipeline_mode<synchronous>, transform_indices = @transform_4, window_bounds = array<i64: 32, 64>}, {pipeline_mode = #tpu.pipeline_mode<synchronous>, transform_indices = @transform_5, window_bounds = array<i64: 32, 1>}, {pipeline_mode = #tpu.pipeline_mode<synchronous>, transform_indices = @transform_6, window_bounds = array<i64: 1, 32>}, {pipeline_mode = #tpu.pipeline_mode<synchronous>, transform_indices = @transform_7, window_bounds = array<i64: 1, 1>}, {transform_indices = @transform_8, window_bounds = array<i64: 1, 8>}]} {
    %c0 = arith.constant 0 : index
    %c0_0 = arith.constant 0 : index
    %0 = vector.load %arg1[%c0, %c0_0] : memref<32x8xbf16, #tpu.memory_space<vmem>>, vector<32x8xbf16>
    %c0_1 = arith.constant 0 : index
    %c0_2 = arith.constant 0 : index
    %1 = vector.load %arg3[%c0_1, %c0_2] : memref<64x32xbf16, #tpu.memory_space<vmem>>, vector<64x32xbf16>
    %cst = arith.constant dense<0.000000e+00> : vector<64x8xf32>
    %2 = tpu.matmul %1, %0, %cst {dimension_numbers = #tpu.dot_dimension_numbers<[1], [0], [0], [1], [0, 0, 1, 1], [], []>} : vector<64x32xbf16>, vector<32x8xbf16>, vector<64x8xf32> -> vector<64x8xf32>
    %c0_3 = arith.constant 0 : index
    %c0_4 = arith.constant 0 : index
    %3 = vector.load %arg4[%c0_3, %c0_4] : memref<64x1xf32, #tpu.memory_space<vmem>>, vector<64x1xf32>
    %4 = vector.broadcast %3 : vector<64x1xf32> to vector<64x8xf32>
    %5 = arith.addf %2, %4 : vector<64x8xf32>
    %cst_5 = arith.constant 0.000000e+00 : f32
    %6 = vector.broadcast %cst_5 : f32 to vector<64x8xf32>
    %7 = arith.maximumf %5, %6 : vector<64x8xf32>
    %c0_6 = arith.constant 0 : index
    %c0_7 = arith.constant 0 : index
    %8 = vector.load %arg5[%c0_6, %c0_7] : memref<32x64xbf16, #tpu.memory_space<vmem>>, vector<32x64xbf16>
    %9 = arith.truncf %7 : vector<64x8xf32> to vector<64x8xbf16>
    %cst_8 = arith.constant dense<0.000000e+00> : vector<32x8xf32>
    %10 = tpu.matmul %8, %9, %cst_8 {dimension_numbers = #tpu.dot_dimension_numbers<[1], [0], [0], [1], [0, 0, 1, 1], [], []>} : vector<32x64xbf16>, vector<64x8xbf16>, vector<32x8xf32> -> vector<32x8xf32>
    %c0_9 = arith.constant 0 : index
    %c0_10 = arith.constant 0 : index
    %11 = vector.load %arg6[%c0_9, %c0_10] : memref<32x1xf32, #tpu.memory_space<vmem>>, vector<32x1xf32>
    %12 = vector.broadcast %11 : vector<32x1xf32> to vector<32x8xf32>
    %13 = arith.addf %10, %12 : vector<32x8xf32>
    %cst_11 = arith.constant 0.000000e+00 : f32
    %14 = vector.broadcast %cst_11 : f32 to vector<32x8xf32>
    %15 = arith.maximumf %13, %14 : vector<32x8xf32>
    %c0_12 = arith.constant 0 : index
    %c0_13 = arith.constant 0 : index
    %16 = vector.load %arg2[%c0_12, %c0_13] : memref<32x8xbf16, #tpu.memory_space<vmem>>, vector<32x8xbf16>
    %17 = arith.extf %16 : vector<32x8xbf16> to vector<32x8xf32>
    %18 = arith.mulf %15, %17 : vector<32x8xf32>
    %c0_14 = arith.constant 0 : index
    %c0_15 = arith.constant 0 : index
    %19 = vector.load %arg7[%c0_14, %c0_15] : memref<1x32xbf16, #tpu.memory_space<vmem>>, vector<1x32xbf16>
    %20 = arith.truncf %18 : vector<32x8xf32> to vector<32x8xbf16>
    %cst_16 = arith.constant dense<0.000000e+00> : vector<1x8xf32>
    %21 = tpu.matmul %19, %20, %cst_16 {dimension_numbers = #tpu.dot_dimension_numbers<[1], [0], [0], [1], [0, 0, 1, 1], [], []>} : vector<1x32xbf16>, vector<32x8xbf16>, vector<1x8xf32> -> vector<1x8xf32>
    %c0_17 = arith.constant 0 : index
    %c0_18 = arith.constant 0 : index
    %22 = vector.load %arg8[%c0_17, %c0_18] : memref<1x1xf32, #tpu.memory_space<vmem>>, vector<1x1xf32>
    %23 = vector.broadcast %22 : vector<1x1xf32> to vector<1x8xf32>
    %24 = arith.addf %21, %23 : vector<1x8xf32>
    %25 = arith.negf %24 : vector<1x8xf32>
    %26 = math.exp %25 : vector<1x8xf32>
    %cst_19 = arith.constant 1.000000e+00 : f32
    %27 = vector.broadcast %cst_19 : f32 to vector<1x8xf32>
    %28 = arith.addf %27, %26 : vector<1x8xf32>
    %29 = arith.divf %27, %28 : vector<1x8xf32>
    %c0_20 = arith.constant 0 : index
    %c0_21 = arith.constant 0 : index
    %30 = vector.load %arg9[%c0_20, %c0_21] : memref<1x8xf32, #tpu.memory_space<vmem>>, vector<1x8xf32>
    tpu.vector_store %arg9[%c0_20, %c0_21], %29 {strides = array<i32>} : memref<1x8xf32, #tpu.memory_space<vmem>>, vector<1x8xf32>,
    return
  }
  func.func @transform_0(%arg0: i32) -> (i32, i32) {
    %c0_i32 = arith.constant 0 : i32
    %c0_i32_0 = arith.constant 0 : i32
    return %c0_i32, %arg0 : i32, i32
  }
  func.func @transform_1(%arg0: i32) -> (i32, i32) {
    %c0_i32 = arith.constant 0 : i32
    %c0_i32_0 = arith.constant 0 : i32
    return %c0_i32, %arg0 : i32, i32
  }
  func.func @transform_2(%arg0: i32) -> (i32, i32) {
    %c0_i32 = arith.constant 0 : i32
    %c0_i32_0 = arith.constant 0 : i32
    %c0_i32_1 = arith.constant 0 : i32
    return %c0_i32, %c0_i32_0 : i32, i32
  }
  func.func @transform_3(%arg0: i32) -> (i32, i32) {
    %c0_i32 = arith.constant 0 : i32
    %c0_i32_0 = arith.constant 0 : i32
    %c0_i32_1 = arith.constant 0 : i32
    return %c0_i32, %c0_i32_0 : i32, i32
  }
  func.func @transform_4(%arg0: i32) -> (i32, i32) {
    %c0_i32 = arith.constant 0 : i32
    %c0_i32_0 = arith.constant 0 : i32
    %c0_i32_1 = arith.constant 0 : i32
    return %c0_i32, %c0_i32_0 : i32, i32
  }
  func.func @transform_5(%arg0: i32) -> (i32, i32) {
    %c0_i32 = arith.constant 0 : i32
    %c0_i32_0 = arith.constant 0 : i32
    %c0_i32_1 = arith.constant 0 : i32
    return %c0_i32, %c0_i32_0 : i32, i32
  }
  func.func @transform_6(%arg0: i32) -> (i32, i32) {
    %c0_i32 = arith.constant 0 : i32
    %c0_i32_0 = arith.constant 0 : i32
    %c0_i32_1 = arith.constant 0 : i32
    return %c0_i32, %c0_i32_0 : i32, i32
  }
  func.func @transform_7(%arg0: i32) -> (i32, i32) {
    %c0_i32 = arith.constant 0 : i32
    %c0_i32_0 = arith.constant 0 : i32
    %c0_i32_1 = arith.constant 0 : i32
    return %c0_i32, %c0_i32_0 : i32, i32
  }
  func.func @transform_8(%arg0: i32) -> (i32, i32) {
    %c0_i32 = arith.constant 0 : i32
    %c0_i32_0 = arith.constant 0 : i32
    return %c0_i32, %arg0 : i32, i32
  }
}

</mosaic_0001>

<llo_original>
// kernel: tpu_custom_call.1
$region0: #{tpu_custom_call.1}
  #allocation0 [shape = 'u32[]', space=smem, size = 0x4, offset = 0x4, fixed_abs, tag = 'smem constant byte address 0x4 - core index']
  #allocation1 [shape = 'u32[144,128]{1,0:T(1,128)}', space=vmem, size = 0x12000, scoped, tag = 'internal scratch']
  #allocation2 [shape = 'f32[1,1]{1,0:T(1,128)S(1)}', space=vmem, size = 0x200, scoped, tag = 'scoped memory for tpu_custom_call.1']
  %s0 = inlined_call_operand.vmem [shape: bf16[32,8], index: 0, kind: input, shape index: {}]
  %s1 = inlined_call_operand.vmem [shape: bf16[32,8], index: 1, kind: input, shape index: {}]
  %s2 = inlined_call_operand.vmem [shape: bf16[64,32], index: 2, kind: input, shape index: {}]
  %s3 = inlined_call_operand.vmem [shape: f32[64,1], index: 3, kind: input, shape index: {}]
  %s4 = inlined_call_operand.vmem [shape: bf16[32,64], index: 4, kind: input, shape index: {}]
  %s5 = inlined_call_operand.vmem [shape: f32[32,1], index: 5, kind: input, shape index: {}]
  %s6 = inlined_call_operand.vmem [shape: bf16[1,32], index: 6, kind: input, shape index: {}]
  %s7 = inlined_call_operand.<no memory space> [shape: f32[1,1], index: 7, kind: input, shape index: {}]
  %s8 = inlined_call_operand.hbm [shape: f32[1,8], index: 8, kind: output, shape index: {}]
  %s9 = sld [smem:[#allocation0]]
  $region42: #{tpu_custom_call.1} parent=0
    _
  %s11 = ssub.s32 1, %s9
  %s12 = scalar_select 0, %s11, %s9
  %v13 = vstv %s7
  %14 = vst [vmem:[#allocation2] sm:$0x1] %v13
  $region1: #{tpu_custom_call.1} parent=0
    #allocation3 [shape = 'u8[512]{0}', space=vmem, size = 0x400, scoped, tag = 'output window, operand 0, single buffered']
    #allocation4 [shape = 's32[1]{0}', space=sflag, size = 0x4, scoped, tag = 'scoped memory for tpu_custom_call.1']
    %15 = vsyncpa [#allocation4], 0
    // Predicated region
    $region2: #{tpu_custom_call.1} parent=1 // pred_check
      _
    $region3: #{tpu_custom_call.1} parent=1 // pred_check_branch
      %17 = sbr.rel (0) target = $region5
    $region4: #{tpu_custom_call.1} parent=1 // pred_region
      _
    $region5: #{tpu_custom_call.1} parent=1 // pred_fallthru
      _
    // Predicated region
    $region6: #{tpu_custom_call.1} parent=1 // pred_check
      _
    $region7: #{tpu_custom_call.1} parent=1 // pred_check_branch
      %19 = sbr.rel (0) target = $region9
    $region8: #{tpu_custom_call.1} parent=1 // pred_region
      _
    $region9: #{tpu_custom_call.1} parent=1 // pred_fallthru
      _
    // Predicated region
    $region10: #{tpu_custom_call.1} parent=1 // pred_check
      _
    $region11: #{tpu_custom_call.1} parent=1 // pred_check_branch
      %21 = sbr.rel (0) target = $region13
    $region12: #{tpu_custom_call.1} parent=1 // pred_region
      _
    $region13: #{tpu_custom_call.1} parent=1 // pred_fallthru
      _
    // Predicated region
    $region14: #{tpu_custom_call.1} parent=1 // pred_check
      _
    $region15: #{tpu_custom_call.1} parent=1 // pred_check_branch
      %23 = sbr.rel (0) target = $region17
    $region16: #{tpu_custom_call.1} parent=1 // pred_region
      _
    $region17: #{tpu_custom_call.1} parent=1 // pred_fallthru
      _
    // Predicated region
    $region18: #{tpu_custom_call.1} parent=1 // pred_check
      _
    $region19: #{tpu_custom_call.1} parent=1 // pred_check_branch
      %25 = sbr.rel (0) target = $region21
    $region20: #{tpu_custom_call.1} parent=1 // pred_region
      _
    $region21: #{tpu_custom_call.1} parent=1 // pred_fallthru
      _
    // Predicated region
    $region22: #{tpu_custom_call.1} parent=1 // pred_check
      _
    $region23: #{tpu_custom_call.1} parent=1 // pred_check_branch
      %27 = sbr.rel (0) target = $region25
    $region24: #{tpu_custom_call.1} parent=1 // pred_region
      _
    $region25: #{tpu_custom_call.1} parent=1 // pred_fallthru
      _
    // Predicated region
    $region26: #{tpu_custom_call.1} parent=1 // pred_check
      _
    $region27: #{tpu_custom_call.1} parent=1 // pred_check_branch
      %29 = sbr.rel (0) target = $region29
    $region28: #{tpu_custom_call.1} parent=1 // pred_region
      _
    $region29: #{tpu_custom_call.1} parent=1 // pred_fallthru
      _
    // Predicated region
    $region30: #{tpu_custom_call.1} parent=1 // pred_check
      _
    $region31: #{tpu_custom_call.1} parent=1 // pred_check_branch
      %31 = sbr.rel (0) target = $region33
    $region32: #{tpu_custom_call.1} parent=1 // pred_region
      _
    $region33: #{tpu_custom_call.1} parent=1 // pred_fallthru
      _
    %v33 = vld [vmem:[%s0] sm:$0xf]
    %v34 = vld [vmem:[%s0 + $0x4] sm:$0xf]
    %v35 = vld [vmem:[%s0 + $0x8] sm:$0xf]
    %v36 = vld [vmem:[%s0 + $0xc] sm:$0xf]
    %v37 = vld [vmem:[%s2] sm:$0xf]
    %v38 = vld [vmem:[%s2 + $0x4] sm:$0xf]
    %v39 = vld [vmem:[%s2 + $0x8] sm:$0xf]
    %v40 = vld [vmem:[%s2 + $0xc] sm:$0xf]
    %v41 = vld [vmem:[%s2 + $0x10] sm:$0xf]
    %v42 = vld [vmem:[%s2 + $0x14] sm:$0xf]
    %v43 = vld [vmem:[%s2 + $0x18] sm:$0xf]
    %v44 = vld [vmem:[%s2 + $0x1c] sm:$0xf]
    %v45 = vld [vmem:[%s3] sm:$0xff]
    %v46 = vld [vmem:[%s3 + $0x8] sm:$0xff]
    %v47 = vld [vmem:[%s3 + $0x10] sm:$0xff]
    %v48 = vld [vmem:[%s3 + $0x18] sm:$0xff]
    %v49 = vld [vmem:[%s3 + $0x20] sm:$0xff]
    %v50 = vld [vmem:[%s3 + $0x28] sm:$0xff]
    %v51 = vld [vmem:[%s3 + $0x30] sm:$0xff]
    %v52 = vld [vmem:[%s3 + $0x38] sm:$0xff]
    %54 = vset.pattern.permute.xlu0 0
    %55 = vperm.xlu0 %54, %v45
    %v56 = vpop.permute.xlu0 %55
    %59 = vset.pattern.permute.xlu0 0
    %60 = vperm.xlu0 %59, %v46
    %v61 = vpop.permute.xlu0 %60
    %64 = vset.pattern.permute.xlu0 0
    %65 = vperm.xlu0 %64, %v47
    %v66 = vpop.permute.xlu0 %65
    %69 = vset.pattern.permute.xlu0 0
    %70 = vperm.xlu0 %69, %v48
    %v71 = vpop.permute.xlu0 %70
    %74 = vset.pattern.permute.xlu0 0
    %75 = vperm.xlu0 %74, %v49
    %v76 = vpop.permute.xlu0 %75
    %79 = vset.pattern.permute.xlu0 0
    %80 = vperm.xlu0 %79, %v50
    %v81 = vpop.permute.xlu0 %80
    %84 = vset.pattern.permute.xlu0 0
    %85 = vperm.xlu0 %84, %v51
    %v86 = vpop.permute.xlu0 %85
    %89 = vset.pattern.permute.xlu0 0
    %90 = vperm.xlu0 %89, %v52
    %v91 = vpop.permute.xlu0 %90
    %v101 = vunpack.c.l.b16 %v37
    %v102 = vunpack.c.l.b16 %v38
    %v103 = vunpack.c.l.b16 %v39
    %v104 = vunpack.c.l.b16 %v40
    %v105 = vunpack.c.l.b16 %v41
    %v106 = vunpack.c.l.b16 %v42
    %v107 = vunpack.c.l.b16 %v43
    %v108 = vunpack.c.l.b16 %v44
    %v109 = vpack.c.b16 %v102, %v101
    %v110 = vpack.c.b16 %v104, %v103
    %v111 = vpack.c.b16 %v106, %v105
    %v112 = vpack.c.b16 %v108, %v107
    %v117 = vunpack.c.l.b16 %v33
    %v118 = vunpack.c.l.b16 %v34
    %v119 = vunpack.c.l.b16 %v35
    %v120 = vunpack.c.l.b16 %v36
    %v121 = vpack.c.b16 %v118, %v117
    %v122 = vpack.c.b16 %v120, %v119
    %vm125 = vcmask 261120
    %v127 = vsel %vm125, %v109, 0
    %v130 = vsel %vm125, %v110, 0
    %v133 = vsel %vm125, %v111, 0
    %v136 = vsel %vm125, %v112, 0
    %138 = vmatprep.subr.bf16.mxu0 0
    %139 = vmatpush1.bf16.msra.mxu0 %v121
    %140 = vmatprep.subr.bf16.mxu0 0
    %141 = vmatpush1.bf16.msra.mxu0 %v122
    %142 = vmatprep.subr.bf16.mxu0 0
    %143 = vmatpush1.bf16.msra.mxu0 0
    %144 = vmatprep.subr.bf16.mxu0 0
    %145 = vmatpush1.bf16.msra.mxu0 0
    %146 = vmatprep.subr.bf16.mxu0 0
    %147 = vmatpush1.bf16.msra.mxu0 0
    %148 = vmatprep.subr.bf16.mxu0 0
    %149 = vmatpush1.bf16.msra.mxu0 0
    %150 = vmatprep.subr.bf16.mxu0 0
    %151 = vmatpush1.bf16.msra.mxu0 0
    %152 = vmatprep.subr.bf16.mxu0 0
    %153 = vmatpush1.bf16.msra.mxu0 0
    %154 = vmatprep.subr.bf16.mxu0 0
    %155 = vmatpush1.bf16.msra.mxu0 0
    %156 = vmatprep.subr.bf16.mxu0 0
    %157 = vmatpush1.bf16.msra.mxu0 0
    %158 = vmatprep.subr.bf16.mxu0 0
    %159 = vmatpush1.bf16.msra.mxu0 0
    %160 = vmatprep.subr.bf16.mxu0 0
    %161 = vmatpush1.bf16.msra.mxu0 0
    %162 = vmatprep.subr.bf16.mxu0 0
    %163 = vmatpush1.bf16.msra.mxu0 0
    %164 = vmatprep.subr.bf16.mxu0 0
    %165 = vmatpush1.bf16.msra.mxu0 0
    %166 = vmatprep.subr.bf16.mxu0 0
    %167 = vmatpush1.bf16.msra.mxu0 0
    %168 = vmatprep.subr.bf16.mxu0 0
    %169 = vmatpush1.bf16.msra.mxu0 0
    %170 = vmatprep.mubr.bf16.mxu0 0
    %171 = vmatmul.mubr.bf16.gmra.mrb[0].mxu0 %v127
    %v172 = vpop.f32.mrb[0].mxu0
    %v173 = vadd.f32 %v56, %v172
    %v174 = vpop.f32.mrb[0].mxu0
    %v175 = vpop.f32.mrb[0].mxu0
    %v176 = vadd.f32 %v61, %v175
    %v177 = vpop.f32.mrb[0].mxu0
    %178 = vmatprep.mubr.bf16.mxu0 0
    %179 = vmatmul.mubr.bf16.gmra.mrb[0].mxu0 %v130
    %v180 = vpop.f32.mrb[0].mxu0
    %v181 = vadd.f32 %v66, %v180
    %v182 = vpop.f32.mrb[0].mxu0
    %v183 = vpop.f32.mrb[0].mxu0
    %v184 = vadd.f32 %v71, %v183
    %v185 = vpop.f32.mrb[0].mxu0
    %186 = vmatprep.mubr.bf16.mxu0 0
    %187 = vmatmul.mubr.bf16.gmra.mrb[0].mxu0 %v133
    %v188 = vpop.f32.mrb[0].mxu0
    %v189 = vadd.f32 %v76, %v188
    %v190 = vpop.f32.mrb[0].mxu0
    %v191 = vpop.f32.mrb[0].mxu0
    %v192 = vadd.f32 %v81, %v191
    %v193 = vpop.f32.mrb[0].mxu0
    %194 = vmatprep.mubr.bf16.mxu0 0
    %195 = vmatmul.mubr.bf16.gmra.mrb[0].mxu0 %v136
    %v196 = vpop.f32.mrb[0].mxu0
    %v197 = vadd.f32 %v86, %v196
    %v198 = vpop.f32.mrb[0].mxu0
    %v199 = vpop.f32.mrb[0].mxu0
    %v200 = vadd.f32 %v91, %v199
    %v201 = vpop.f32.mrb[0].mxu0
    %202 = vdwg.mxu0
    %v203 = vmax.f32 %v173, 0.0
    %v204 = vmax.f32 %v176, 0.0
    %v205 = vmax.f32 %v181, 0.0
    %v206 = vmax.f32 %v184, 0.0
    %v207 = vmax.f32 %v189, 0.0
    %v208 = vmax.f32 %v192, 0.0
    %v209 = vmax.f32 %v197, 0.0
    %v210 = vmax.f32 %v200, 0.0
    %v211 = vld [vmem:[%s4] sm:$0xf]
    %v212 = vld [vmem:[%s4 + $0x4] sm:$0xf]
    %v213 = vld [vmem:[%s4 + $0x8] sm:$0xf]
    %v214 = vld [vmem:[%s4 + $0xc] sm:$0xf]
    %v215 = vpack.c.bf16 %v204, %v203
    %v216 = vpack.c.bf16 %v206, %v205
    %v217 = vpack.c.bf16 %v208, %v207
    %v218 = vpack.c.bf16 %v210, %v209
    %v219 = vld [vmem:[%s5] sm:$0xff]
    %v220 = vld [vmem:[%s5 + $0x8] sm:$0xff]
    %v221 = vld [vmem:[%s5 + $0x10] sm:$0xff]
    %v222 = vld [vmem:[%s5 + $0x18] sm:$0xff]
    %224 = vset.pattern.permute.xlu0 0
    %225 = vperm.xlu0 %224, %v219
    %v226 = vpop.permute.xlu0 %225
    %229 = vset.pattern.permute.xlu0 0
    %230 = vperm.xlu0 %229, %v220
    %v231 = vpop.permute.xlu0 %230
    %234 = vset.pattern.permute.xlu0 0
    %235 = vperm.xlu0 %234, %v221
    %v236 = vpop.permute.xlu0 %235
    %239 = vset.pattern.permute.xlu0 0
    %240 = vperm.xlu0 %239, %v222
    %v241 = vpop.permute.xlu0 %240
    %v247 = vunpack.c.l.b16 %v211
    %v248 = vunpack.c.l.b16 %v212
    %v249 = vunpack.c.l.b16 %v213
    %v250 = vunpack.c.l.b16 %v214
    %v251 = vpack.c.b16 %v248, %v247
    %v252 = vpack.c.b16 %v250, %v249
    %vm253 = vcmask 523264
    %v255 = vsel %vm253, %v251, 0
    %v258 = vsel %vm253, %v252, 0
    %260 = vmatprep.subr.bf16.mxu0 0
    %261 = vmatpush1.bf16.msra.mxu0 %v215
    %262 = vmatprep.subr.bf16.mxu0 0
    %263 = vmatpush1.bf16.msra.mxu0 %v216
    %264 = vmatprep.subr.bf16.mxu0 0
    %265 = vmatpush1.bf16.msra.mxu0 %v217
    %266 = vmatprep.subr.bf16.mxu0 0
    %267 = vmatpush1.bf16.msra.mxu0 %v218
    %268 = vmatprep.subr.bf16.mxu0 0
    %269 = vmatpush1.bf16.msra.mxu0 0
    %270 = vmatprep.subr.bf16.mxu0 0
    %271 = vmatpush1.bf16.msra.mxu0 0
    %272 = vmatprep.subr.bf16.mxu0 0
    %273 = vmatpush1.bf16.msra.mxu0 0
    %274 = vmatprep.subr.bf16.mxu0 0
    %275 = vmatpush1.bf16.msra.mxu0 0
    %276 = vmatprep.subr.bf16.mxu0 0
    %277 = vmatpush1.bf16.msra.mxu0 0
    %278 = vmatprep.subr.bf16.mxu0 0
    %279 = vmatpush1.bf16.msra.mxu0 0
    %280 = vmatprep.subr.bf16.mxu0 0
    %281 = vmatpush1.bf16.msra.mxu0 0
    %282 = vmatprep.subr.bf16.mxu0 0
    %283 = vmatpush1.bf16.msra.mxu0 0
    %284 = vmatprep.subr.bf16.mxu0 0
    %285 = vmatpush1.bf16.msra.mxu0 0
    %286 = vmatprep.subr.bf16.mxu0 0
    %287 = vmatpush1.bf16.msra.mxu0 0
    %288 = vmatprep.subr.bf16.mxu0 0
    %289 = vmatpush1.bf16.msra.mxu0 0
    %290 = vmatprep.subr.bf16.mxu0 0
    %291 = vmatpush1.bf16.msra.mxu0 0
    %292 = vmatprep.mubr.bf16.mxu0 0
    %293 = vmatmul.mubr.bf16.gmra.mrb[0].mxu0 %v255
    %v294 = vpop.f32.mrb[0].mxu0
    %v295 = vadd.f32 %v226, %v294
    %v296 = vpop.f32.mrb[0].mxu0
    %v297 = vpop.f32.mrb[0].mxu0
    %v298 = vadd.f32 %v231, %v297
    %v299 = vpop.f32.mrb[0].mxu0
    %300 = vmatprep.mubr.bf16.mxu0 0
    %301 = vmatmul.mubr.bf16.gmra.mrb[0].mxu0 %v258
    %v302 = vpop.f32.mrb[0].mxu0
    %v303 = vadd.f32 %v236, %v302
    %v304 = vpop.f32.mrb[0].mxu0
    %v305 = vpop.f32.mrb[0].mxu0
    %v306 = vadd.f32 %v241, %v305
    %v307 = vpop.f32.mrb[0].mxu0
    %308 = vdwg.mxu0
    %v309 = vmax.f32 %v295, 0.0
    %v310 = vmax.f32 %v298, 0.0
    %v311 = vmax.f32 %v303, 0.0
    %v312 = vmax.f32 %v306, 0.0
    %v313 = vld [vmem:[%s1] sm:$0xf]
    %v314 = vld [vmem:[%s1 + $0x4] sm:$0xf]
    %v315 = vld [vmem:[%s1 + $0x8] sm:$0xf]
    %v316 = vld [vmem:[%s1 + $0xc] sm:$0xf]
    %v317 = vunpack.c.l.bf16 %v313
    %v318 = vunpack.c.l.bf16 %v314
    %v319 = vunpack.c.l.bf16 %v315
    %v320 = vunpack.c.l.bf16 %v316
    %v321 = vmul.f32 %v309, %v317
    %v322 = vmul.f32 %v310, %v318
    %v323 = vmul.f32 %v311, %v319
    %v324 = vmul.f32 %v312, %v320
    %v325 = vld [vmem:[%s6] sm:$0x1]
    %v326 = vpack.c.bf16 %v322, %v321
    %v327 = vpack.c.bf16 %v324, %v323
    %v328 = vld [vmem:[#allocation2] sm:$0x1]
    %330 = vset.pattern.permute.xlu0 0
    %331 = vperm.xlu0 %330, %v328
    %v332 = vpop.permute.xlu0 %331
    %v334 = vlaneseq
    %v335 = vshrl.u32 %v334, 7
    %v336 = vsub.s32 0, %v335
    %v337 = vrot.slane %v332, %v336
    %v339 = vsel %vm125, %v325, 0
    %341 = vmatprep.subr.bf16.mxu0 0
    %342 = vmatpush1.bf16.msra.mxu0 %v326
    %343 = vmatprep.subr.bf16.mxu0 0
    %344 = vmatpush1.bf16.msra.mxu0 %v327
    %345 = vmatprep.subr.bf16.mxu0 0
    %346 = vmatpush1.bf16.msra.mxu0 0
    %347 = vmatprep.subr.bf16.mxu0 0
    %348 = vmatpush1.bf16.msra.mxu0 0
    %349 = vmatprep.subr.bf16.mxu0 0
    %350 = vmatpush1.bf16.msra.mxu0 0
    %351 = vmatprep.subr.bf16.mxu0 0
    %352 = vmatpush1.bf16.msra.mxu0 0
    %353 = vmatprep.subr.bf16.mxu0 0
    %354 = vmatpush1.bf16.msra.mxu0 0
    %355 = vmatprep.subr.bf16.mxu0 0
    %356 = vmatpush1.bf16.msra.mxu0 0
    %357 = vmatprep.subr.bf16.mxu0 0
    %358 = vmatpush1.bf16.msra.mxu0 0
    %359 = vmatprep.subr.bf16.mxu0 0
    %360 = vmatpush1.bf16.msra.mxu0 0
    %361 = vmatprep.subr.bf16.mxu0 0
    %362 = vmatpush1.bf16.msra.mxu0 0
    %363 = vmatprep.subr.bf16.mxu0 0
    %364 = vmatpush1.bf16.msra.mxu0 0
    %365 = vmatprep.subr.bf16.mxu0 0
    %366 = vmatpush1.bf16.msra.mxu0 0
    %367 = vmatprep.subr.bf16.mxu0 0
    %368 = vmatpush1.bf16.msra.mxu0 0
    %369 = vmatprep.subr.bf16.mxu0 0
    %370 = vmatpush1.bf16.msra.mxu0 0
    %371 = vmatprep.subr.bf16.mxu0 0
    %372 = vmatpush1.bf16.msra.mxu0 0
    %373 = vmatprep.mubr.bf16.mxu0 0
    %374 = vmatmul.mubr.bf16.gmra.mrb[0].mxu0 %v339
    %v375 = vpop.f32.mrb[0].mxu0
    %v376 = vadd.f32 %v337, %v375
    %v377 = vpop.f32.mrb[0].mxu0
    %v378 = vpop.f32.mrb[0].mxu0
    %v379 = vpop.f32.mrb[0].mxu0
    %380 = vdwg.mxu0
    %v381 = vxor.u32 %v376, 2147483648
    %v382 = vmul.f32 %v381, 1.442695
    %v383 = vpow.pop %v382
    %v384 = vadd.f32 %v383, 1.0
    %v385 = vrcp.pop %v384
    %v386 = vmul.f32 1.0, %v385
    %vm387 = vcmask 57344
    %388 = vst.msk [vmem:[#allocation3] sm:$0x1] %vm387, %v386
    // Predicated region
    $region34: #{tpu_custom_call.1} parent=1 // pred_check
      _
    $region35: #{tpu_custom_call.1} parent=1 // pred_check_branch
      %390 = sbr.rel (0) target = $region37
    $region36: #{tpu_custom_call.1} parent=1 // pred_region
      %s392 = ssub.s32 16, 16
      %393 = vsyncadd [#allocation4], %s392
      %s395 = sshll.u32 [#allocation3], 4
      %s396 = int_to_ptr.vmem [resolvable:$true] %s395
      %398 = dma.vmem_to_hbm [thread:$0]  %s396, 16, %s8, [#allocation4]
    $region37: #{tpu_custom_call.1} parent=1 // pred_fallthru
      _
    // Predicated region
    $region38: #{tpu_custom_call.1} parent=1 // pred_check
      _
    $region39: #{tpu_custom_call.1} parent=1 // pred_check_branch
      %400 = sbr.rel (0) target = $region41
    $region40: #{tpu_custom_call.1} parent=1 // pred_region
      %401 = dma.done [#allocation4], 16
    $region41: #{tpu_custom_call.1} parent=1 // pred_fallthru
      _
    %402 = vsyncpa [#allocation4], 1

</llo_original>
